<compile_context>
chip_gen: v5e
topology: v5e:2x2
jax: 0.10.0
libtpu: 0.0.40
codegen_flags: <defaults>
</compile_context>

<pallas_src>
import functools

import jax
import jax.numpy as jnp
from jax.experimental import pallas as pl
from jax.experimental.pallas import tpu as pltpu


# ----------------------------------------------------------------------------
# Pallas kernel: adapter linear (VPU+XLU) -> softmax (VPU/EUP) -> mix (VPU)
# ----------------------------------------------------------------------------
def prompt_forward_kernel(hint_ref, w_ref, b_ref, bank_ref,
                          prompts_ref, bias_ref, *, domain_num):
    # hint_ref : (B, K)  f32  VMEM   flattened detached encoder features
    # w_ref    : (D, K)  f32  VMEM   adapter weight, lane-dense (nn.Linear layout)
    # b_ref    : (D,)    f32  SMEM   adapter bias (scalar reads)
    # bank_ref : (D, P)  f32  VMEM   prompt bank flattened, P = prompt_num*g*g
    # prompts_ref : (B, P) f32
    # bias_ref    : (B, D) f32
    h = hint_ref[...]                                        # (B, K) f32
    batch = h.shape[0]

    # ---- adapter(hint): D unrolled VPU multiplies + XLU lane-reductions ----
    # (MXU-free: an N = 4 result tile would be almost empty.)
    logits = []
    for d in range(domain_num):                              # static unroll, D small
        dot_d = jnp.sum(h * w_ref[d:d + 1, :], axis=-1, keepdims=True)  # (B, 1)
        logits.append(dot_d + b_ref[d])                      # + scalar bias from SMEM

    # ---- F.softmax(all_bias, dim=-1): fully element-wise over the D columns --
    m = logits[0]
    for d in range(1, domain_num):
        m = jnp.maximum(m, logits[d])
    exps = [jnp.exp(l - m) for l in logits]                  # EUP
    s = exps[0]
    for d in range(1, domain_num):
        s = s + exps[d]
    inv = pl.reciprocal(s, approx=False)                     # exact 1/x, f32
    bias_cols = [e * inv for e in exps]                      # D x (B, 1)

    # ---- prompt mix: acc[b, p] = sum_d bias[b, d] * bank[d, p] (VPU FMAs) ----
    # Each bank row is broadcast exactly once, so there is no repeated
    # broadcast_in_dim to hoist.  (A pl.ds(..., stride=0) broadcast-load was
    # considered but Slice requires stride >= 1 in current JAX.)
    acc = bias_cols[0] * bank_ref[0:1, :]                    # (B,1)*(1,P) -> (B,P)
    for d in range(1, domain_num):
        acc = acc + bias_cols[d] * bank_ref[d:d + 1, :]
    prompts_ref[...] = acc                                   # (B, P) lane-dense store

    # ---- assemble the narrow (B, D) bias output without a minor-dim concat --
    lane = jax.lax.broadcasted_iota(jnp.int32, (batch, domain_num), 1)
    bias_out = jnp.zeros((batch, domain_num), jnp.float32)
    for d in range(domain_num):
        bias_out = jnp.where(lane == d, bias_cols[d], bias_out)
    bias_ref[...] = bias_out                                 # module contract: (B, D)


def prompt_forward(hint_nchw, adapter_w, adapter_b, prompt_bank):
    """Pallas version of PromptTransUnet.prompt_forward.

    hint_nchw   : (B, C, g, g)   encoder_out (detached here, like .detach())
    adapter_w   : (D, K)         nn.Linear weight layout, K = C*g*g
    adapter_b   : (D,)
    prompt_bank : (D, prompt_num, g, g)
    returns     : domain_prompts (B, prompt_num, g, g), all_bias (B, D)
    """
    B = hint_nchw.shape[0]
    D, prompt_num, g, _ = prompt_bank.shape

    hint = jax.lax.stop_gradient(hint_nchw)                 # == encoder_out.detach()
    hint_flat = hint.reshape(B, -1).astype(jnp.float32)     # (B, K), contiguous reshape
    K = hint_flat.shape[1]
    w = adapter_w.astype(jnp.float32)                       # (D, K) lane-dense
    b = adapter_b.astype(jnp.float32)                       # (D,)   -> SMEM
    bank_flat = prompt_bank.reshape(D, -1).astype(jnp.float32)  # (D, P)
    P = bank_flat.shape[1]

    kernel = functools.partial(prompt_forward_kernel, domain_num=D)

    cost = pl.CostEstimate(
        flops=2 * B * K * D + 2 * B * D * P + 8 * B * D,
        transcendentals=B * D,
        bytes_accessed=4 * (B * K + D * K + D + D * P + B * P + B * D),
    )

    prompts_flat, all_bias = pl.pallas_call(
        kernel,
        out_shape=(
            jax.ShapeDtypeStruct((B, P), jnp.float32),
            jax.ShapeDtypeStruct((B, D), jnp.float32),
        ),
        in_specs=[
            pl.BlockSpec(memory_space=pltpu.MemorySpace.VMEM),   # hint (f32)
            pl.BlockSpec(memory_space=pltpu.MemorySpace.VMEM),   # adapter W (f32, (D,K))
            pl.BlockSpec(memory_space=pltpu.MemorySpace.SMEM),   # adapter b (f32 scalars)
            pl.BlockSpec(memory_space=pltpu.MemorySpace.VMEM),   # prompt bank (f32)
        ],
        out_specs=(
            pl.BlockSpec(memory_space=pltpu.MemorySpace.VMEM),
            pl.BlockSpec(memory_space=pltpu.MemorySpace.VMEM),
        ),
        cost_estimate=cost,
    )(hint_flat, w, b, bank_flat)

    domain_prompts = prompts_flat.reshape(B, prompt_num, g, g)
    return domain_prompts, all_bias


# TODO(synk): vision_encoder (ViT-B/16 + ResNet50 hybrid), PromptDecoder,
#             PadPrompter and the meta-learning internals of Project are
#             external modules not defined in the given source.


if __name__ == "__main__":
    key = jax.random.PRNGKey(0)
    k_hint, k_w, k_bank = jax.random.split(key, 3)

    # Shapes consistent with the module at img_size=128: g = 128 // 16 = 8,
    # adapter in-dim = g*g*8 (the hint the adapter flattens has 8 channels).
    # B = 8 so rows fill all 8 sublanes of each f32 vreg.
    B = 8
    g = 8                      # img_size // patch_size
    C = 8                      # channel dim the adapter flattens over
    domain_num = 4
    prompt_num = 4
    K = C * g * g              # 512

    # Deterministic init mirroring __init__:
    #   adapter Linear  -> xavier_normal_ weight stored (out, in), zero bias
    #   prompt_bank     -> normal(std=0.02)
    xavier_std = (2.0 / (K + domain_num)) ** 0.5
    adapter_w = xavier_std * jax.random.normal(k_w, (domain_num, K), jnp.float32)
    adapter_b = jnp.zeros((domain_num,), jnp.float32)
    prompt_bank = 0.02 * jax.random.normal(
        k_bank, (domain_num, prompt_num, g, g), jnp.float32)

    # Synthetic detached encoder output (stand-in for encoder_out[0]).
    hint = jax.random.normal(k_hint, (B, C, g, g), jnp.float32)

    domain_prompts, all_bias = prompt_forward(hint, adapter_w, adapter_b,
                                              prompt_bank)
    jax.block_until_ready((domain_prompts, all_bias))

    # Full-f32 reference with exact module semantics (HIGHEST precision so the
    # reference matmul is true f32, like the kernel's VPU reductions).
    hint_flat = hint.reshape(B, -1)
    bank_flat = prompt_bank.reshape(domain_num, -1)
    logits_f = jnp.dot(hint_flat, adapter_w.T,
                       precision=jax.lax.Precision.HIGHEST) + adapter_b
    bias_f = jax.nn.softmax(logits_f, axis=-1)
    prompts_f = jnp.dot(bias_f, bank_flat,
                        precision=jax.lax.Precision.HIGHEST
                        ).reshape(B, prompt_num, g, g)

    assert all_bias.shape == (B, domain_num)
    assert domain_prompts.shape == (B, prompt_num, g, g)
    assert jnp.allclose(all_bias, bias_f, atol=1e-4, rtol=1e-4)
    assert jnp.allclose(domain_prompts, prompts_f, atol=1e-4, rtol=1e-4)

    print("KERNEL_OK")
</pallas_src>

<mosaic_0001>
module attributes {stable_mosaic.version = 11 : i64} {
  func.func @prompt_forward_kernel(%arg0: memref<8x512xf32, #tpu.memory_space<vmem>>, %arg1: memref<4x512xf32, #tpu.memory_space<vmem>>, %arg2: memref<4xf32, #tpu.memory_space<smem>>, %arg3: memref<4x256xf32, #tpu.memory_space<vmem>>, %arg4: memref<8x256xf32, #tpu.memory_space<vmem>>, %arg5: memref<8x4xf32, #tpu.memory_space<vmem>>) attributes {dimension_semantics = [], scalar_prefetch = 0 : i64, scratch_operands = 0 : i64, tpu.core_type = #tpu.core_type<tc>} {
    %c0 = arith.constant 0 : index
    %c0_0 = arith.constant 0 : index
    %0 = vector.load %arg0[%c0, %c0_0] : memref<8x512xf32, #tpu.memory_space<vmem>>, vector<8x512xf32>
    %c0_1 = arith.constant 0 : index
    %c0_2 = arith.constant 0 : index
    %1 = vector.load %arg1[%c0_1, %c0_2] : memref<4x512xf32, #tpu.memory_space<vmem>>, vector<1x512xf32>
    %2 = vector.broadcast %1 : vector<1x512xf32> to vector<8x512xf32>
    %3 = arith.mulf %0, %2 : vector<8x512xf32>
    %cst = arith.constant dense<0.000000e+00> : vector<8xf32>
    %4 = vector.multi_reduction <add>, %3, %cst [1] : vector<8x512xf32> to vector<8xf32>
    %5 = vector.shape_cast %4 : vector<8xf32> to vector<8x1xf32>
    %c0_3 = arith.constant 0 : index
    %6 = memref.load %arg2[%c0_3] : memref<4xf32, #tpu.memory_space<smem>>
    %7 = vector.broadcast %6 : f32 to vector<8x1xf32>
    %8 = arith.addf %5, %7 : vector<8x1xf32>
    %c1 = arith.constant 1 : index
    %c0_4 = arith.constant 0 : index
    %9 = vector.load %arg1[%c1, %c0_4] : memref<4x512xf32, #tpu.memory_space<vmem>>, vector<1x512xf32>
    %10 = vector.broadcast %9 : vector<1x512xf32> to vector<8x512xf32>
    %11 = arith.mulf %0, %10 : vector<8x512xf32>
    %cst_5 = arith.constant dense<0.000000e+00> : vector<8xf32>
    %12 = vector.multi_reduction <add>, %11, %cst_5 [1] : vector<8x512xf32> to vector<8xf32>
    %13 = vector.shape_cast %12 : vector<8xf32> to vector<8x1xf32>
    %c1_6 = arith.constant 1 : index
    %14 = memref.load %arg2[%c1_6] : memref<4xf32, #tpu.memory_space<smem>>
    %15 = vector.broadcast %14 : f32 to vector<8x1xf32>
    %16 = arith.addf %13, %15 : vector<8x1xf32>
    %c2 = arith.constant 2 : index
    %c0_7 = arith.constant 0 : index
    %17 = vector.load %arg1[%c2, %c0_7] : memref<4x512xf32, #tpu.memory_space<vmem>>, vector<1x512xf32>
    %18 = vector.broadcast %17 : vector<1x512xf32> to vector<8x512xf32>
    %19 = arith.mulf %0, %18 : vector<8x512xf32>
    %cst_8 = arith.constant dense<0.000000e+00> : vector<8xf32>
    %20 = vector.multi_reduction <add>, %19, %cst_8 [1] : vector<8x512xf32> to vector<8xf32>
    %21 = vector.shape_cast %20 : vector<8xf32> to vector<8x1xf32>
    %c2_9 = arith.constant 2 : index
    %22 = memref.load %arg2[%c2_9] : memref<4xf32, #tpu.memory_space<smem>>
    %23 = vector.broadcast %22 : f32 to vector<8x1xf32>
    %24 = arith.addf %21, %23 : vector<8x1xf32>
    %c3 = arith.constant 3 : index
    %c0_10 = arith.constant 0 : index
    %25 = vector.load %arg1[%c3, %c0_10] : memref<4x512xf32, #tpu.memory_space<vmem>>, vector<1x512xf32>
    %26 = vector.broadcast %25 : vector<1x512xf32> to vector<8x512xf32>
    %27 = arith.mulf %0, %26 : vector<8x512xf32>
    %cst_11 = arith.constant dense<0.000000e+00> : vector<8xf32>
    %28 = vector.multi_reduction <add>, %27, %cst_11 [1] : vector<8x512xf32> to vector<8xf32>
    %29 = vector.shape_cast %28 : vector<8xf32> to vector<8x1xf32>
    %c3_12 = arith.constant 3 : index
    %30 = memref.load %arg2[%c3_12] : memref<4xf32, #tpu.memory_space<smem>>
    %31 = vector.broadcast %30 : f32 to vector<8x1xf32>
    %32 = arith.addf %29, %31 : vector<8x1xf32>
    %33 = arith.maximumf %8, %16 : vector<8x1xf32>
    %34 = arith.maximumf %33, %24 : vector<8x1xf32>
    %35 = arith.maximumf %34, %32 : vector<8x1xf32>
    %36 = arith.subf %8, %35 : vector<8x1xf32>
    %37 = math.exp %36 : vector<8x1xf32>
    %38 = arith.subf %16, %35 : vector<8x1xf32>
    %39 = math.exp %38 : vector<8x1xf32>
    %40 = arith.subf %24, %35 : vector<8x1xf32>
    %41 = math.exp %40 : vector<8x1xf32>
    %42 = arith.subf %32, %35 : vector<8x1xf32>
    %43 = math.exp %42 : vector<8x1xf32>
    %44 = arith.addf %37, %39 : vector<8x1xf32>
    %45 = arith.addf %44, %41 : vector<8x1xf32>
    %46 = arith.addf %45, %43 : vector<8x1xf32>
    %47 = tpu.reciprocal %46 : vector<8x1xf32> -> vector<8x1xf32>
    %48 = arith.mulf %37, %47 : vector<8x1xf32>
    %49 = arith.mulf %39, %47 : vector<8x1xf32>
    %50 = arith.mulf %41, %47 : vector<8x1xf32>
    %51 = arith.mulf %43, %47 : vector<8x1xf32>
    %c0_13 = arith.constant 0 : index
    %c0_14 = arith.constant 0 : index
    %52 = vector.load %arg3[%c0_13, %c0_14] : memref<4x256xf32, #tpu.memory_space<vmem>>, vector<1x256xf32>
    %53 = vector.broadcast %48 : vector<8x1xf32> to vector<8x256xf32>
    %54 = vector.broadcast %52 : vector<1x256xf32> to vector<8x256xf32>
    %55 = arith.mulf %53, %54 : vector<8x256xf32>
    %c1_15 = arith.constant 1 : index
    %c0_16 = arith.constant 0 : index
    %56 = vector.load %arg3[%c1_15, %c0_16] : memref<4x256xf32, #tpu.memory_space<vmem>>, vector<1x256xf32>
    %57 = vector.broadcast %49 : vector<8x1xf32> to vector<8x256xf32>
    %58 = vector.broadcast %56 : vector<1x256xf32> to vector<8x256xf32>
    %59 = arith.mulf %57, %58 : vector<8x256xf32>
    %60 = arith.addf %55, %59 : vector<8x256xf32>
    %c2_17 = arith.constant 2 : index
    %c0_18 = arith.constant 0 : index
    %61 = vector.load %arg3[%c2_17, %c0_18] : memref<4x256xf32, #tpu.memory_space<vmem>>, vector<1x256xf32>
    %62 = vector.broadcast %50 : vector<8x1xf32> to vector<8x256xf32>
    %63 = vector.broadcast %61 : vector<1x256xf32> to vector<8x256xf32>
    %64 = arith.mulf %62, %63 : vector<8x256xf32>
    %65 = arith.addf %60, %64 : vector<8x256xf32>
    %c3_19 = arith.constant 3 : index
    %c0_20 = arith.constant 0 : index
    %66 = vector.load %arg3[%c3_19, %c0_20] : memref<4x256xf32, #tpu.memory_space<vmem>>, vector<1x256xf32>
    %67 = vector.broadcast %51 : vector<8x1xf32> to vector<8x256xf32>
    %68 = vector.broadcast %66 : vector<1x256xf32> to vector<8x256xf32>
    %69 = arith.mulf %67, %68 : vector<8x256xf32>
    %70 = arith.addf %65, %69 : vector<8x256xf32>
    %c0_21 = arith.constant 0 : index
    %c0_22 = arith.constant 0 : index
    %71 = vector.load %arg4[%c0_21, %c0_22] : memref<8x256xf32, #tpu.memory_space<vmem>>, vector<8x256xf32>
    tpu.vector_store %arg4[%c0_21, %c0_22], %70 {strides = array<i32>} : memref<8x256xf32, #tpu.memory_space<vmem>>, vector<8x256xf32>,
    %72 = tpu.iota {dimensions = array<i32: 1>} : vector<8x4xi32>
    %cst_23 = arith.constant 0.000000e+00 : f32
    %73 = vector.broadcast %cst_23 : f32 to vector<8x4xf32>
    %c0_i32 = arith.constant 0 : i32
    %74 = vector.broadcast %c0_i32 : i32 to vector<8x4xi32>
    %75 = arith.cmpi eq, %72, %74 : vector<8x4xi32>
    %76 = vector.shape_cast %48 : vector<8x1xf32> to vector<8x1xf32>
    %77 = vector.broadcast %76 : vector<8x1xf32> to vector<8x4xf32>
    %78 = arith.select %75, %77, %73 : vector<8x4xi1>, vector<8x4xf32>
    %c1_i32 = arith.constant 1 : i32
    %79 = vector.broadcast %c1_i32 : i32 to vector<8x4xi32>
    %80 = arith.cmpi eq, %72, %79 : vector<8x4xi32>
    %81 = vector.shape_cast %49 : vector<8x1xf32> to vector<8x1xf32>
    %82 = vector.broadcast %81 : vector<8x1xf32> to vector<8x4xf32>
    %83 = arith.select %80, %82, %78 : vector<8x4xi1>, vector<8x4xf32>
    %c2_i32 = arith.constant 2 : i32
    %84 = vector.broadcast %c2_i32 : i32 to vector<8x4xi32>
    %85 = arith.cmpi eq, %72, %84 : vector<8x4xi32>
    %86 = vector.shape_cast %50 : vector<8x1xf32> to vector<8x1xf32>
    %87 = vector.broadcast %86 : vector<8x1xf32> to vector<8x4xf32>
    %88 = arith.select %85, %87, %83 : vector<8x4xi1>, vector<8x4xf32>
    %c3_i32 = arith.constant 3 : i32
    %89 = vector.broadcast %c3_i32 : i32 to vector<8x4xi32>
    %90 = arith.cmpi eq, %72, %89 : vector<8x4xi32>
    %91 = vector.shape_cast %51 : vector<8x1xf32> to vector<8x1xf32>
    %92 = vector.broadcast %91 : vector<8x1xf32> to vector<8x4xf32>
    %93 = arith.select %90, %92, %88 : vector<8x4xi1>, vector<8x4xf32>
    %c0_24 = arith.constant 0 : index
    %c0_25 = arith.constant 0 : index
    %94 = vector.load %arg5[%c0_24, %c0_25] : memref<8x4xf32, #tpu.memory_space<vmem>>, vector<8x4xf32>
    tpu.vector_store %arg5[%c0_24, %c0_25], %93 {strides = array<i32>} : memref<8x4xf32, #tpu.memory_space<vmem>>, vector<8x4xf32>,
    return
  }
}

</mosaic_0001>

<llo_original>
// kernel: tpu_custom_call.1
$region0: #{tpu_custom_call.1}
  #allocation0 [shape = 'u32[]', space=smem, size = 0x4, offset = 0x4, fixed_abs, tag = 'smem constant byte address 0x4 - core index']
  #allocation1 [shape = 'u32[72,128]{1,0:T(1,128)}', space=vmem, size = 0x9000, scoped, tag = 'internal scratch']
  %s0 = inlined_call_operand.hbm [shape: f32[8,512], index: 0, kind: input, shape index: {}]
  %s1 = inlined_call_operand.hbm [shape: f32[4,512], index: 1, kind: input, shape index: {}]
  %s2 = inlined_call_operand.vmem [shape: f32[4], index: 2, kind: input, shape index: {}]
  %s3 = inlined_call_operand.hbm [shape: f32[4,256], index: 3, kind: input, shape index: {}]
  %s4 = inlined_call_operand.hbm [shape: f32[8,256], index: 4, kind: output, shape index: {0}]
  %s5 = inlined_call_operand.vmem [shape: f32[8,4], index: 5, kind: output, shape index: {1}]
  %6 = xla_tuple %s4, %s5
  %s7 = sld [smem:[#allocation0]]
  $region50: #{tpu_custom_call.1} parent=0
    _
  %s9 = ssub.s32 1, %s7
  %s10 = scalar_select 0, %s9, %s7
  $region1: #{tpu_custom_call.1} parent=0
    #allocation2 [shape = 'u8[16384]{0}', space=vmem, size = 0x4000, scoped, tag = 'input window, operand 0, single buffered']
    #allocation3 [shape = 's32[1]{0}', space=sflag, size = 0x4, scoped, tag = 'scoped memory for tpu_custom_call.1']
    #allocation4 [shape = 's32[1]{0}', space=sflag, size = 0x4, scoped, tag = 'scoped memory for tpu_custom_call.1']
    #allocation5 [shape = 's32[1]{0}', space=sflag, size = 0x4, scoped, tag = 'scoped memory for tpu_custom_call.1']
    #allocation6 [shape = 'u8[8192]{0}', space=vmem, size = 0x2000, scoped, tag = 'input window, operand 1, single buffered']
    #allocation7 [shape = 's32[1]{0}', space=sflag, size = 0x4, scoped, tag = 'scoped memory for tpu_custom_call.1']
    #allocation8 [shape = 'u8[512]{0}', space=smem, size = 0x200, scoped, tag = 'input window, operand 2, single buffered']
    #allocation9 [shape = 'u8[4096]{0}', space=vmem, size = 0x1000, scoped, tag = 'input window, operand 3, single buffered']
    #allocation10 [shape = 'u8[8192]{0}', space=vmem, size = 0x2000, scoped, tag = 'output window, operand 0, single buffered']
    %11 = vsyncpa [#allocation3], 0
    %12 = vsyncpa [#allocation7], 0
    %13 = vsyncpa [#allocation5], 0
    %14 = vsyncpa [#allocation4], 0
    // Predicated region
    $region2: #{tpu_custom_call.1} parent=1 // pred_check
      _
    $region3: #{tpu_custom_call.1} parent=1 // pred_check_branch
      %16 = sbr.rel (0) target = $region5
    $region4: #{tpu_custom_call.1} parent=1 // pred_region
      %18 = vsyncadd [#allocation3], 0
      %s20 = sshll.u32 %s0, 4
      %s21 = int_to_ptr.hbm [resolvable:$true] %s20
      %s22 = sshll.u32 [#allocation2], 4
      %s23 = int_to_ptr.vmem [resolvable:$true] %s22
      %25 = dma.hbm_to_vmem [thread:$0]  %s21, 512, %s23, [#allocation3]
    $region5: #{tpu_custom_call.1} parent=1 // pred_fallthru
      _
    // Predicated region
    $region6: #{tpu_custom_call.1} parent=1 // pred_check
      _
    $region7: #{tpu_custom_call.1} parent=1 // pred_check_branch
      %27 = sbr.rel (0) target = $region9
    $region8: #{tpu_custom_call.1} parent=1 // pred_region
      %29 = vsyncadd [#allocation7], 0
      %s31 = sshll.u32 %s1, 4
      %s32 = int_to_ptr.hbm [resolvable:$true] %s31
      %s33 = sshll.u32 [#allocation6], 4
      %s34 = int_to_ptr.vmem [resolvable:$true] %s33
      %36 = dma.hbm_to_vmem [thread:$0]  %s32, 256, %s34, [#allocation7]
    $region9: #{tpu_custom_call.1} parent=1 // pred_fallthru
      _
    // Predicated region
    $region10: #{tpu_custom_call.1} parent=1 // pred_check
      _
    $region11: #{tpu_custom_call.1} parent=1 // pred_check_branch
      %38 = sbr.rel (0) target = $region13
    $region12: #{tpu_custom_call.1} parent=1 // pred_region
      %40 = vsyncadd [#allocation5], 0
      %s42 = sshll.u32 %s2, 4
      %s43 = int_to_ptr.vmem [resolvable:$true] %s42
      %45 = dma.vmem_to_smem %s43, 16, [#allocation8], [#allocation5]
    $region13: #{tpu_custom_call.1} parent=1 // pred_fallthru
      _
    // Predicated region
    $region14: #{tpu_custom_call.1} parent=1 // pred_check
      _
    $region15: #{tpu_custom_call.1} parent=1 // pred_check_branch
      %47 = sbr.rel (0) target = $region17
    $region16: #{tpu_custom_call.1} parent=1 // pred_region
      %49 = vsyncadd [#allocation7], 0
      %s51 = sshll.u32 %s3, 4
      %s52 = int_to_ptr.hbm [resolvable:$true] %s51
      %s53 = sshll.u32 [#allocation9], 4
      %s54 = int_to_ptr.vmem [resolvable:$true] %s53
      %56 = dma.hbm_to_vmem [thread:$0]  %s52, 128, %s54, [#allocation7]
    $region17: #{tpu_custom_call.1} parent=1 // pred_fallthru
      _
    // Predicated region
    $region18: #{tpu_custom_call.1} parent=1 // pred_check
      _
    $region19: #{tpu_custom_call.1} parent=1 // pred_check_branch
      %58 = sbr.rel (0) target = $region21
    $region20: #{tpu_custom_call.1} parent=1 // pred_region
      %60 = dma.done [#allocation3], 512
    $region21: #{tpu_custom_call.1} parent=1 // pred_fallthru
      _
    // Predicated region
    $region22: #{tpu_custom_call.1} parent=1 // pred_check
      _
    $region23: #{tpu_custom_call.1} parent=1 // pred_check_branch
      %62 = sbr.rel (0) target = $region25
    $region24: #{tpu_custom_call.1} parent=1 // pred_region
      %64 = dma.done [#allocation7], 256
    $region25: #{tpu_custom_call.1} parent=1 // pred_fallthru
      _
    // Predicated region
    $region26: #{tpu_custom_call.1} parent=1 // pred_check
      _
    $region27: #{tpu_custom_call.1} parent=1 // pred_check_branch
      %66 = sbr.rel (0) target = $region29
    $region28: #{tpu_custom_call.1} parent=1 // pred_region
      %68 = dma.done [#allocation5], 16
    $region29: #{tpu_custom_call.1} parent=1 // pred_fallthru
      _
    // Predicated region
    $region30: #{tpu_custom_call.1} parent=1 // pred_check
      _
    $region31: #{tpu_custom_call.1} parent=1 // pred_check_branch
      %70 = sbr.rel (0) target = $region33
    $region32: #{tpu_custom_call.1} parent=1 // pred_region
      %72 = dma.done [#allocation7], 128
    $region33: #{tpu_custom_call.1} parent=1 // pred_fallthru
      _
    %73 = sfence
    %v74 = vld [vmem:[#allocation2] sm:$0xff]
    %v75 = vld [vmem:[#allocation2 + $0x8] sm:$0xff]
    %v76 = vld [vmem:[#allocation2 + $0x10] sm:$0xff]
    %v77 = vld [vmem:[#allocation2 + $0x18] sm:$0xff]
    %v78 = vld [vmem:[#allocation6] ss:$4 sm:$0xf]
    %v80 = vperm.slane %v78, 0
    %v81 = vperm.slane %v78, 1
    %v82 = vperm.slane %v78, 2
    %v83 = vperm.slane %v78, 3
    %v88 = vmul.f32 %v74, %v80
    %v89 = vmul.f32 %v75, %v81
    %v90 = vmul.f32 %v76, %v82
    %v91 = vmul.f32 %v77, %v83
    %v92 = vadd.f32 %v88, %v89
    %v93 = vadd.f32 %v92, %v90
    %v94 = vadd.f32 %v93, %v91
    %95 = vadd.xlane.f32.xlu0 %v94
    %v96 = vpop.xlane.xlu0 %95
    %s97 = sld [smem:[#allocation8]]
    %v98 = vstv %s97
    %v99 = vadd.f32 %v96, %v98
    %s100 = scalar_lea.vmem [#allocation6], 1
    %v101 = vld [vmem:[%s100] ss:$4 sm:$0xf]
    %v103 = vperm.slane %v101, 0
    %v104 = vperm.slane %v101, 1
    %v105 = vperm.slane %v101, 2
    %v106 = vperm.slane %v101, 3
    %v111 = vmul.f32 %v74, %v103
    %v112 = vmul.f32 %v75, %v104
    %v113 = vmul.f32 %v76, %v105
    %v114 = vmul.f32 %v77, %v106
    %v115 = vadd.f32 %v111, %v112
    %v116 = vadd.f32 %v115, %v113
    %v117 = vadd.f32 %v116, %v114
    %118 = vadd.xlane.f32.xlu0 %v117
    %v119 = vpop.xlane.xlu0 %118
    %s120 = sld [smem:[#allocation8 + $0x1]]
    %v121 = vstv %s120
    %v122 = vadd.f32 %v119, %v121
    %s123 = scalar_lea.vmem [#allocation6], 2
    %v124 = vld [vmem:[%s123] ss:$4 sm:$0xf]
    %v126 = vperm.slane %v124, 0
    %v127 = vperm.slane %v124, 1
    %v128 = vperm.slane %v124, 2
    %v129 = vperm.slane %v124, 3
    %v134 = vmul.f32 %v74, %v126
    %v135 = vmul.f32 %v75, %v127
    %v136 = vmul.f32 %v76, %v128
    %v137 = vmul.f32 %v77, %v129
    %v138 = vadd.f32 %v134, %v135
    %v139 = vadd.f32 %v138, %v136
    %v140 = vadd.f32 %v139, %v137
    %141 = vadd.xlane.f32.xlu0 %v140
    %v142 = vpop.xlane.xlu0 %141
    %s143 = sld [smem:[#allocation8 + $0x2]]
    %v144 = vstv %s143
    %v145 = vadd.f32 %v142, %v144
    %s146 = scalar_lea.vmem [#allocation6], 3
    %v147 = vld [vmem:[%s146] ss:$4 sm:$0xf]
    %v149 = vperm.slane %v147, 0
    %v150 = vperm.slane %v147, 1
    %v151 = vperm.slane %v147, 2
    %v152 = vperm.slane %v147, 3
    %v157 = vmul.f32 %v74, %v149
    %v158 = vmul.f32 %v75, %v150
    %v159 = vmul.f32 %v76, %v151
    %v160 = vmul.f32 %v77, %v152
    %v161 = vadd.f32 %v157, %v158
    %v162 = vadd.f32 %v161, %v159
    %v163 = vadd.f32 %v162, %v160
    %164 = vadd.xlane.f32.xlu0 %v163
    %v165 = vpop.xlane.xlu0 %164
    %s166 = sld [smem:[#allocation8 + $0x3]]
    %v167 = vstv %s166
    %v168 = vadd.f32 %v165, %v167
    %v169 = vmax.f32 %v99, %v122
    %v170 = vmax.f32 %v169, %v145
    %v171 = vmax.f32 %v170, %v168
    %v172 = vsub.f32 %v99, %v171
    %v173 = vmul.f32 %v172, 1.442695
    %v174 = vpow.pop %v173
    %v175 = vsub.f32 %v122, %v171
    %v176 = vmul.f32 %v175, 1.442695
    %v177 = vpow.pop %v176
    %v178 = vsub.f32 %v145, %v171
    %v179 = vmul.f32 %v178, 1.442695
    %v180 = vpow.pop %v179
    %v181 = vsub.f32 %v168, %v171
    %v182 = vmul.f32 %v181, 1.442695
    %v183 = vpow.pop %v182
    %v184 = vadd.f32 %v174, %v177
    %v185 = vadd.f32 %v184, %v180
    %v186 = vadd.f32 %v185, %v183
    %v187 = vrcp.pop %v186
    %v188 = vmul.f32 %v186, %v187
    %v189 = vsub.f32 1.0, %v188
    %v190 = vmul.f32 %v187, %v189
    %v191 = vadd.f32 %v187, %v190
    %vm192 = vweird.f32 %v186
    %vm193 = vweird.f32 %v187
    %vm194 = vmor %vm192, %vm193
    %v195 = vsel %vm194, %v187, %v191
    %v196 = vand.u32 2147483647, %v186
    %vm197 = vcmp.eq.f32.partialorder %v196, 8.507059e+37
    %v198 = vand.u32 %v186, 2147483648
    %v199 = vor.u32 1.1754944e-38, %v198
    %v200 = vsel %vm197, %v199, %v195
    %v201 = vmul.f32 %v174, %v200
    %v202 = vmul.f32 %v177, %v200
    %v203 = vmul.f32 %v180, %v200
    %v204 = vmul.f32 %v183, %v200
    %v205 = vld [vmem:[#allocation9] ss:$4 sm:$0x3]
    %v207 = vperm.slane %v205, 0
    %v208 = vperm.slane %v205, 1
    %v211 = vmul.f32 %v201, %v207
    %v212 = vmul.f32 %v201, %v208
    %s213 = scalar_lea.vmem [#allocation9], 1
    %v214 = vld [vmem:[%s213] ss:$4 sm:$0x3]
    %v216 = vperm.slane %v214, 0
    %v217 = vperm.slane %v214, 1
    %v220 = vmul.f32 %v202, %v216
    %v221 = vmul.f32 %v202, %v217
    %v222 = vadd.f32 %v211, %v220
    %v223 = vadd.f32 %v212, %v221
    %s224 = scalar_lea.vmem [#allocation9], 2
    %v225 = vld [vmem:[%s224] ss:$4 sm:$0x3]
    %v227 = vperm.slane %v225, 0
    %v228 = vperm.slane %v225, 1
    %v231 = vmul.f32 %v203, %v227
    %v232 = vmul.f32 %v203, %v228
    %v233 = vadd.f32 %v222, %v231
    %v234 = vadd.f32 %v223, %v232
    %s235 = scalar_lea.vmem [#allocation9], 3
    %v236 = vld [vmem:[%s235] ss:$4 sm:$0x3]
    %v238 = vperm.slane %v236, 0
    %v239 = vperm.slane %v236, 1
    %v242 = vmul.f32 %v204, %v238
    %v243 = vmul.f32 %v204, %v239
    %v244 = vadd.f32 %v233, %v242
    %v245 = vadd.f32 %v234, %v243
    %246 = vst [vmem:[#allocation10] sm:$0xff] %v244
    %247 = vst [vmem:[#allocation10 + $0x8] sm:$0xff] %v245
    %v248 = vlaneseq
    %v249 = vand.u32 %v248, 127
    %vm250 = vcmp.eq.s32.totalorder %v249, 0
    %v251 = vsel %vm250, %v201, 0.0
    %vm252 = vcmp.eq.s32.totalorder %v249, 1
    %v253 = vsel %vm252, %v202, %v251
    %vm254 = vcmp.eq.s32.totalorder %v249, 2
    %v255 = vsel %vm254, %v203, %v253
    %vm256 = vcmp.eq.s32.totalorder %v249, 3
    %v257 = vsel %vm256, %v204, %v255
    %vm258 = vcmask 31744
    %259 = vst.msk [vmem:[%s5] sm:$0xff] %vm258, %v257
    // Predicated region
    $region34: #{tpu_custom_call.1} parent=1 // pred_check
      _
    $region35: #{tpu_custom_call.1} parent=1 // pred_check_branch
      %261 = sbr.rel (0) target = $region37
    $region36: #{tpu_custom_call.1} parent=1 // pred_region
      %263 = vsyncadd [#allocation4], 0
      %s265 = sshll.u32 [#allocation10], 4
      %s266 = int_to_ptr.vmem [resolvable:$true] %s265
      %s267 = sshll.u32 %s4, 4
      %s268 = int_to_ptr.hbm [resolvable:$true] %s267
      %270 = dma.vmem_to_hbm [thread:$0]  %s266, 256, %s268, [#allocation4]
    $region37: #{tpu_custom_call.1} parent=1 // pred_fallthru
      _
    // Predicated region
    $region38: #{tpu_custom_call.1} parent=1 // pred_check
      _
    $region39: #{tpu_custom_call.1} parent=1 // pred_check_branch
      %272 = sbr.rel (0) target = $region41
    $region40: #{tpu_custom_call.1} parent=1 // pred_region
      _
    $region41: #{tpu_custom_call.1} parent=1 // pred_fallthru
      _
    // Predicated region
    $region42: #{tpu_custom_call.1} parent=1 // pred_check
      _
    $region43: #{tpu_custom_call.1} parent=1 // pred_check_branch
      %274 = sbr.rel (0) target = $region45
    $region44: #{tpu_custom_call.1} parent=1 // pred_region
      %276 = dma.done [#allocation4], 256
    $region45: #{tpu_custom_call.1} parent=1 // pred_fallthru
      _
    // Predicated region
    $region46: #{tpu_custom_call.1} parent=1 // pred_check
      _
    $region47: #{tpu_custom_call.1} parent=1 // pred_check_branch
      %278 = sbr.rel (0) target = $region49
    $region48: #{tpu_custom_call.1} parent=1 // pred_region
      _
    $region49: #{tpu_custom_call.1} parent=1 // pred_fallthru
      _
    %279 = vsyncpa [#allocation3], 1
    %280 = vsyncpa [#allocation7], 1
    %281 = vsyncpa [#allocation4], 1
    %282 = vsyncpa [#allocation5], 1

</llo_original>
